<compile_context>
chip_gen: v7x
topology: tpu7x:2x2x1
jax: 0.10.0
libtpu: 0.0.40
codegen_flags: <defaults>
</compile_context>

<pallas_src>
import functools

import jax
import jax.numpy as jnp
from jax.experimental import pallas as pl
from jax.experimental.pallas import tpu as pltpu


# ---------------------------------------------------------------------------
# Per-generation VMEM / tile budgeting.
# ---------------------------------------------------------------------------
def _vmem_limit_bytes():
    """Half the physical per-core VMEM (v5e/v6e 128 MiB, v7x 64 MiB): safe on
    every generation; used both as vmem_limit_bytes and to size tiles."""
    cap = 0
    try:
        cap = int(pltpu.get_tpu_info().vmem_capacity_bytes)
    except Exception:
        cap = 0
    if cap <= 0:
        cap = 64 << 20                    # conservative fallback (v7x physical)
    return cap // 2


def _round_up(x, m):
    return (x + m - 1) // m * m


def _pick_channel_tile(c, hw_pad, vreg_budget=32 << 10):
    """Channel tile for the dwconv kernel: even, multiple of 8 (sublane tiling)
    or == c, dividing c.  Prefer the largest tile whose (tc, hw_pad) f32 slab
    stays within ~8 vregs (headroom against spills); else the smallest legal."""
    cands = sorted({t for t in range(8, c, 8) if c % t == 0} | {c})
    best = cands[0]
    for t in cands:
        if 4 * t * hw_pad <= vreg_budget:
            best = t
    return best


def _pick_spatial_tile(hw, c, itemsize, max_bytes):
    """Lane tile for the streaming (pool / fuse) kernels: multiple of 128
    dividing hw, sized against the per-generation VMEM budget."""
    if c * hw * itemsize <= max_bytes:
        return hw
    t = (max_bytes // (c * itemsize)) // 128 * 128
    t = min(max(t, 128), hw)
    while t >= 128:
        if hw % t == 0:
            return t
        t -= 128
    # TODO(synk): pad hw to a multiple of 128 instead of one full-size block.
    return hw


def _pick_pool_channel_tile(b, c):
    """Extra 'parallel' channel axis so the pool kernel has >= 2 parallel grid
    steps even when b == 1 (v7x megacore)."""
    if b >= 2 or c < 16:
        return c
    for t in range(c // 2, 7, -1):
        if c % t == 0 and t % 8 == 0:
            return t
    return c


# ---------------------------------------------------------------------------
# Kernel 1: global average pool (spatial sum, accumulated over hw tiles).
# ---------------------------------------------------------------------------
def _pool_kernel(rgb_ref, t_ref, rsum_ref, tsum_ref):
    @pl.when(pl.program_id(2) == 0)
    def _():
        rsum_ref[...] = jnp.zeros_like(rsum_ref)
        tsum_ref[...] = jnp.zeros_like(tsum_ref)

    rsum_ref[...] += jnp.sum(rgb_ref[...].astype(jnp.float32), axis=2,
                             keepdims=True)
    tsum_ref[...] += jnp.sum(t_ref[...].astype(jnp.float32), axis=2,
                             keepdims=True)


def spatial_sum(rgb2, t2, tcp, thw, vmem_limit):
    b, c, hw = rgb2.shape
    spec_in = pl.BlockSpec((1, tcp, thw), lambda i, jc, jh: (i, jc, jh))
    spec_out = pl.BlockSpec((1, tcp, 1), lambda i, jc, jh: (i, jc, 0))
    return pl.pallas_call(
        _pool_kernel,
        out_shape=(jax.ShapeDtypeStruct((b, c, 1), jnp.float32),
                   jax.ShapeDtypeStruct((b, c, 1), jnp.float32)),
        grid=(b, c // tcp, hw // thw),
        in_specs=[spec_in, spec_in],
        out_specs=(spec_out, spec_out),
        compiler_params=pltpu.CompilerParams(
            dimension_semantics=("parallel", "parallel", "arbitrary"),
            vmem_limit_bytes=vmem_limit),
    )(rgb2, t2)


# ---------------------------------------------------------------------------
# Kernel 2: grouped 7x7 conv (gate folded into weights) + global max pool,
# on the zero-padded (h+6) x w_pad layout (w_pad a multiple of 128).
#   acc1[k] = conv(x[k], wa[k])  -> channel k's contribution to output k
#   acc2[k] = conv(x[k], wb[k])  -> channel k's contribution to output k^1
#   out[k]  = acc1[k] + acc2[k^1]   (pair swap: 2 sublane rolls + select)
# Conv bias is added in the glue after the max (max(s + b) = max(s) + b).
# ---------------------------------------------------------------------------
def _dwconv_max_kernel(x_ref, wa_ref, wb_ref, mask_ref, max_ref, rot_ref,
                       *, w_pad, h):
    tc, hw_pad = rot_ref.shape
    out_len = h * w_pad
    wa = wa_ref[0]                                # (tc, 49) f32
    wb = wb_ref[0]
    acc1 = jnp.zeros((tc, out_len), jnp.float32)
    acc2 = jnp.zeros((tc, out_len), jnp.float32)

    for kx in range(7):
        dx = kx - 3
        x = x_ref[0].astype(jnp.float32)          # (tc, hw_pad)
        # one lane rotation per kx (7 total); wrap artifacts only ever land in
        # pad columns that are masked out of the max below.
        rot_ref[...] = x if dx == 0 else pltpu.roll(x, shift=(-dx) % hw_pad,
                                                    axis=1)
        for ky in range(7):
            t = ky * 7 + kx
            # 128-aligned slice (ky*w_pad is a multiple of 128): plain vld.
            sl = rot_ref[:, ky * w_pad: ky * w_pad + out_len]
            acc1 = acc1 + sl * wa[:, t:t + 1]
            acc2 = acc2 + sl * wb[:, t:t + 1]

    # pair swap acc2[k] -> acc2[k ^ 1]: exact, 2 sublane rotations + select
    # (wrapped rows are never selected because of the parity mask).
    up = pltpu.roll(acc2, shift=1, axis=0)        # up[i] = acc2[i - 1]
    dn = pltpu.roll(acc2, shift=tc - 1, axis=0)   # dn[i] = acc2[i + 1]
    row = jax.lax.broadcasted_iota(jnp.int32, (tc, out_len), 0)
    out = acc1 + jnp.where((row & 1) == 0, dn, up)

    # exclude pad columns once, right before the max.
    out = jnp.where(mask_ref[...] > 0.0, out, jnp.float32(-3.4e38))
    max_ref[0] = jnp.max(out, axis=1, keepdims=True)   # AdaptiveMaxPool2d(1)


def dwconv_spatial_max(x_pad, wa, wb, col_mask, *, w_pad, h, tc, vmem_limit):
    nb, c, hw_pad = x_pad.shape
    out_len = h * w_pad
    return pl.pallas_call(
        functools.partial(_dwconv_max_kernel, w_pad=w_pad, h=h),
        out_shape=jax.ShapeDtypeStruct((nb, c, 1), jnp.float32),
        grid=(nb, c // tc),
        in_specs=[
            pl.BlockSpec((1, tc, hw_pad), lambda i, j: (i, j, 0)),
            pl.BlockSpec((1, tc, 49), lambda i, j: (i, j, 0)),
            pl.BlockSpec((1, tc, 49), lambda i, j: (i, j, 0)),
            pl.BlockSpec((1, out_len), lambda i, j: (0, 0)),
        ],
        out_specs=pl.BlockSpec((1, tc, 1), lambda i, j: (i, j, 0)),
        scratch_shapes=[pltpu.VMEM((tc, hw_pad), jnp.float32)],
        compiler_params=pltpu.CompilerParams(
            dimension_semantics=("parallel", "parallel"),
            vmem_limit_bytes=vmem_limit),
    )(x_pad, wa, wb, col_mask)


# ---------------------------------------------------------------------------
# Kernel 3: per-channel fusion scales, 1x1 attention convs as channel reduces,
# 2-way softmax folded into sigmoid(fr - ft), final fusion.  hw-tiled grid.
# ---------------------------------------------------------------------------
def _fuse_kernel(rgb_ref, t_ref, sr_ref, st_ref, wr_ref, wt_ref, bd_ref,
                 orgb_ref, ot_ref):
    new_rgb = rgb_ref[0].astype(jnp.float32) * sr_ref[0]      # (c, thw) * (c,1)
    new_t = t_ref[0].astype(jnp.float32) * st_ref[0]
    # 1x1 "spatial attention" convs: broadcast-mul + channel-sum (no MXU).
    fr = jnp.sum(new_rgb * wr_ref[...], axis=0, keepdims=True)   # (1, thw)
    ft = jnp.sum(new_t * wt_ref[...], axis=0, keepdims=True)
    # softmax over the 2 logits == sigmoid of their difference (bias folded).
    al = 1.0 / (1.0 + jnp.exp(-(fr - ft + bd_ref[...])))
    t_part = new_t * (1.0 - al)
    orgb_ref[0] = (new_rgb * al + t_part).astype(orgb_ref.dtype)
    ot_ref[0] = t_part.astype(ot_ref.dtype)


def fuse(rgb2, t2, sr, st, wr, wt, bd, thw, vmem_limit):
    b, c, hw = rgb2.shape
    io_spec = pl.BlockSpec((1, c, thw), lambda i, j: (i, 0, j))
    scale_spec = pl.BlockSpec((1, c, 1), lambda i, j: (i, 0, 0))
    return pl.pallas_call(
        _fuse_kernel,
        out_shape=(jax.ShapeDtypeStruct((b, c, hw), rgb2.dtype),
                   jax.ShapeDtypeStruct((b, c, hw), t2.dtype)),
        grid=(b, hw // thw),
        in_specs=[io_spec, io_spec, scale_spec, scale_spec,
                  pl.BlockSpec((c, 1), lambda i, j: (0, 0)),
                  pl.BlockSpec((c, 1), lambda i, j: (0, 0)),
                  pl.BlockSpec((1, 1), lambda i, j: (0, 0))],
        out_specs=(io_spec, io_spec),
        compiler_params=pltpu.CompilerParams(
            dimension_semantics=("parallel", "parallel"),
            vmem_limit_bytes=vmem_limit),
    )(rgb2, t2, sr, st, wr, wt, bd)


# ---------------------------------------------------------------------------
# Glue: parameter init, tiny MLPs, cross-gate diagonal trick, kernel calls.
# ---------------------------------------------------------------------------
def init_params(key, dim, ratio=16):
    ks = jax.random.split(key, 20)
    c, c2 = dim, 2 * dim

    def mlp_p(k0, k1, k2, k3, din, dhid):
        return {
            "wd": 0.2 * jax.random.normal(k0, (din, dhid), jnp.float32),
            "bd": 0.1 * jax.random.normal(k1, (dhid,), jnp.float32),
            "wu": 0.2 * jax.random.normal(k2, (dhid, din), jnp.float32),
            "bu": 0.1 * jax.random.normal(k3, (din,), jnp.float32),
        }

    return {
        "pool_rgb": mlp_p(ks[0], ks[1], ks[2], ks[3], c, c // ratio),
        "pool_t": mlp_p(ks[4], ks[5], ks[6], ks[7], c, c // ratio),
        "cse": mlp_p(ks[8], ks[9], ks[10], ks[11], c2, c2 // ratio),
        "dw_w": 0.05 * jax.random.normal(ks[12], (c2, 2, 7, 7), jnp.float32),
        "dw_b": 0.05 * jax.random.normal(ks[13], (c2,), jnp.float32),
        "sse_r_w": 0.1 * jax.random.normal(ks[14], (c,), jnp.float32),
        "sse_r_b": 0.1 * jax.random.normal(ks[15], (1,), jnp.float32),
        "sse_t_w": 0.1 * jax.random.normal(ks[16], (c,), jnp.float32),
        "sse_t_b": 0.1 * jax.random.normal(ks[17], (1,), jnp.float32),
    }


def _mlp(y, p):
    hp = jax.lax.Precision.HIGHEST      # tiny matmuls; keep them bit-stable
    h1 = jax.nn.gelu(jnp.dot(y, p["wd"], precision=hp) + p["bd"],
                     approximate=False)  # exact erf-GELU (torch nn.GELU default)
    return jnp.dot(h1, p["wu"], precision=hp) + p["bu"]


def eaef_forward(RGB, T, params):
    b, c, h, w = RGB.shape
    assert c % 2 == 0, "groups=dim depthwise conv pairing assumes even dim"
    assert b <= c, "torch.diagonal(...).reshape(b,c,1,1) requires b <= c"
    hw = h * w
    c2 = 2 * c
    rgb2 = RGB.reshape(b, c, hw)          # native dtype, upcast inside kernels
    t2 = T.reshape(b, c, hw)

    vmem_limit = _vmem_limit_bytes()
    stream_budget = min(1 << 20, vmem_limit // 12)   # v5e-safe per-block bytes
    thw = _pick_spatial_tile(hw, c, rgb2.dtype.itemsize, stream_budget)
    tcp = _pick_pool_channel_tile(b, c)

    # ---- Feature_Pool (avg pool kernel + tiny MLP) ----
    rsum, tsum = spatial_sum(rgb2, t2, tcp, thw, vmem_limit)
    inv_hw = 1.0 / hw
    rgb_y = _mlp(rsum[..., 0] * inv_hw, params["pool_rgb"])     # (b, c)
    t_y = _mlp(tsum[..., 0] * inv_hw, params["pool_t"])
    rgb_y = rgb_y / jnp.linalg.norm(rgb_y, axis=1, keepdims=True)
    t_y = t_y / jnp.linalg.norm(t_y, axis=1, keepdims=True)

    # ---- cross gate, exactly reproducing torch.diagonal(dim1=0, dim2=1) ----
    logits_per = c * rgb_y[:, :, None] * t_y[:, None, :]        # (b, c, c)
    sig = jax.nn.sigmoid(logits_per)
    cross_gate = jnp.diagonal(sig, axis1=0, axis2=1).reshape(b, c)  # (b, c)

    # ---- fold the cross gate + group structure into per-batch conv weights --
    # groups=dim: group g owns input/output channels (2g, 2g+1); with c even
    # the first c channels are RGB-only groups and the last c are T-only.
    W = params["dw_w"].reshape(c2, 2, 49)
    k_idx = jnp.arange(c)
    mem = k_idx % 2
    par = k_idx ^ 1
    cgk = cross_gate[:, :, None]                                 # (b, c, 1)
    wa_r = W[k_idx, mem][None] * cgk                             # (b, c, 49)
    wb_r = W[par, mem][None] * cgk
    wa_t = W[c + k_idx, mem][None] * cgk
    wb_t = W[c + par, mem][None] * cgk
    wa_all = jnp.concatenate([wa_r, wa_t], axis=0)               # (2b, c, 49)
    wb_all = jnp.concatenate([wb_r, wb_t], axis=0)

    # ---- zero-padded, 128-aligned-row layout for the dwconv (no tap masks) --
    w_pad = _round_up(w + 6, 128)
    hw_pad = (h + 6) * w_pad
    out_len = h * w_pad

    def pad_flat(x):          # (b,c,h,w) -> (b,c,(h+6)*w_pad), native dtype
        xp = jnp.pad(x, ((0, 0), (0, 0), (3, 3), (3, w_pad - w - 3)))
        return xp.reshape(x.shape[0], c, hw_pad)

    x_all = jnp.concatenate([pad_flat(RGB), pad_flat(T)], axis=0)  # (2b, c, .)

    cols = jnp.arange(out_len, dtype=jnp.int32) % w_pad
    col_mask = ((cols >= 3) & (cols < 3 + w)).astype(jnp.float32)
    col_mask = col_mask.reshape(1, out_len)

    tc = _pick_channel_tile(c, hw_pad)
    max_all = dwconv_spatial_max(x_all, wa_all, wb_all, col_mask,
                                 w_pad=w_pad, h=h, tc=tc,
                                 vmem_limit=vmem_limit)            # (2b, c, 1)
    # max(conv + bias) == max(conv) + bias -> add the dwconv bias here (exact).
    maxvec = (jnp.concatenate([max_all[:b, :, 0], max_all[b:, :, 0]], axis=1)
              + params["dw_b"][None, :])                           # (b, 2c)

    # ---- Channel_Attention MLP + sigmoid (tiny, glue) ----
    fuse_gate = jax.nn.sigmoid(_mlp(maxvec, params["cse"]))       # (b, 2c)
    rgb_gate = fuse_gate[:, :c]
    t_gate = fuse_gate[:, c:]

    # per-channel fusion scales: New_X = X * (1 - cg + cg * gate)
    sr = (1.0 - cross_gate + cross_gate * rgb_gate)[..., None]    # (b, c, 1)
    st = (1.0 - cross_gate + cross_gate * t_gate)[..., None]

    wr = params["sse_r_w"].reshape(c, 1)
    wt = params["sse_t_w"].reshape(c, 1)
    bd = (params["sse_r_b"] - params["sse_t_b"]).reshape(1, 1)    # bias diff

    out_rgb, out_t = fuse(rgb2, t2, sr, st, wr, wt, bd, thw, vmem_limit)
    return out_rgb.reshape(b, c, h, w), out_t.reshape(b, c, h, w)


# ---------------------------------------------------------------------------
# Pure-JAX reference (faithful to the PyTorch module, incl. diagonal quirk).
# ---------------------------------------------------------------------------
def eaef_reference(RGB, T, params):
    b, c, h, w = RGB.shape
    x_rgb = RGB.astype(jnp.float32)
    x_t = T.astype(jnp.float32)
    rgb_y = _mlp(jnp.mean(x_rgb, axis=(2, 3)), params["pool_rgb"])
    t_y = _mlp(jnp.mean(x_t, axis=(2, 3)), params["pool_t"])
    rgb_y = rgb_y / jnp.linalg.norm(rgb_y, axis=1, keepdims=True)
    t_y = t_y / jnp.linalg.norm(t_y, axis=1, keepdims=True)
    logits = c * rgb_y[:, :, None] * t_y[:, None, :]
    cross_gate = jnp.diagonal(jax.nn.sigmoid(logits), axis1=0,
                              axis2=1).reshape(b, c, 1, 1)
    add_gate = 1.0 - cross_gate
    new_rgb_a = x_rgb * cross_gate
    new_t_a = x_t * cross_gate
    x_cat = jnp.concatenate([new_rgb_a, new_t_a], axis=1)
    conv = jax.lax.conv_general_dilated(
        x_cat, params["dw_w"], window_strides=(1, 1),
        padding=((3, 3), (3, 3)), dimension_numbers=("NCHW", "OIHW", "NCHW"),
        feature_group_count=c, precision=jax.lax.Precision.HIGHEST)
    conv = conv + params["dw_b"][None, :, None, None]
    fuse_gate = jax.nn.sigmoid(
        _mlp(jnp.max(conv, axis=(2, 3)), params["cse"]))[:, :, None, None]
    rgb_gate, t_gate = fuse_gate[:, :c], fuse_gate[:, c:]
    new_rgb = x_rgb * add_gate + new_rgb_a * rgb_gate
    new_t = x_t * add_gate + new_t_a * t_gate
    fr = jnp.sum(new_rgb * params["sse_r_w"][None, :, None, None], axis=1,
                 keepdims=True) + params["sse_r_b"][0]
    ft = jnp.sum(new_t * params["sse_t_w"][None, :, None, None], axis=1,
                 keepdims=True) + params["sse_t_b"][0]
    att = jax.nn.softmax(jnp.concatenate([fr, ft], axis=1), axis=1)
    al, ar = att[:, 0:1], att[:, 1:2]
    return new_rgb * al + new_t * ar, new_t * ar


if __name__ == "__main__":
    key = jax.random.PRNGKey(0)
    k_rgb, k_t, k_par = jax.random.split(key, 3)
    b, c, h, w = 2, 32, 16, 16          # dim=32 (pool hidden 2, cse hidden 4)
    RGB = jax.random.normal(k_rgb, (b, c, h, w), jnp.float32)
    T = jax.random.normal(k_t, (b, c, h, w), jnp.float32)
    params = init_params(k_par, c)

    new_rgb, new_t = eaef_forward(RGB, T, params)
    jax.block_until_ready((new_rgb, new_t))
    assert new_rgb.shape == (b, c, h, w) and new_t.shape == (b, c, h, w)

    ref_rgb, ref_t = eaef_reference(RGB, T, params)
    assert jnp.allclose(new_rgb, ref_rgb, atol=1e-3, rtol=1e-3), \
        "RGB output mismatch vs pure-JAX reference"
    assert jnp.allclose(new_t, ref_t, atol=1e-3, rtol=1e-3), \
        "T output mismatch vs pure-JAX reference"
    print("KERNEL_OK")
</pallas_src>

<mosaic_0001>
module attributes {stable_mosaic.version = 11 : i64} {
  func.func @_pool_kernel(%arg0: i32, %arg1: i32, %arg2: i32, %arg3: memref<1x32x256xf32, #tpu.memory_space<vmem>>, %arg4: memref<1x32x256xf32, #tpu.memory_space<vmem>>, %arg5: memref<1x32x1xf32, #tpu.memory_space<vmem>>, %arg6: memref<1x32x1xf32, #tpu.memory_space<vmem>>) attributes {dimension_semantics = [#tpu.dimension_semantics<parallel>, #tpu.dimension_semantics<parallel>, #tpu.dimension_semantics<arbitrary>], iteration_bounds = array<i64: 2, 1, 1>, scalar_prefetch = 0 : i64, scratch_operands = 0 : i64, tpu.core_type = #tpu.core_type<tc>, window_params = [{transform_indices = @transform_0, window_bounds = array<i64: 1, 32, 256>}, {transform_indices = @transform_1, window_bounds = array<i64: 1, 32, 256>}, {transform_indices = @transform_2, window_bounds = array<i64: 1, 32, 1>}, {transform_indices = @transform_3, window_bounds = array<i64: 1, 32, 1>}]} {
    %c0_i32 = arith.constant 0 : i32
    %0 = arith.cmpi eq, %arg2, %c0_i32 : i32
    %1 = arith.extui %0 : i1 to i32
    %c0_i32_0 = arith.constant 0 : i32
    %2 = arith.cmpi ne, %1, %c0_i32_0 : i32
    scf.if %2 {
      %cst_19 = arith.constant 0.000000e+00 : f32
      %15 = vector.broadcast %cst_19 : f32 to vector<1x32x1xf32>
      %c0_20 = arith.constant 0 : index
      %c0_21 = arith.constant 0 : index
      %c0_22 = arith.constant 0 : index
      %16 = vector.load %arg5[%c0_20, %c0_21, %c0_22] : memref<1x32x1xf32, #tpu.memory_space<vmem>>, vector<1x32x1xf32>
      tpu.vector_store %arg5[%c0_20, %c0_21, %c0_22], %15 {strides = array<i32>} : memref<1x32x1xf32, #tpu.memory_space<vmem>>, vector<1x32x1xf32>,
      %cst_23 = arith.constant 0.000000e+00 : f32
      %17 = vector.broadcast %cst_23 : f32 to vector<1x32x1xf32>
      %c0_24 = arith.constant 0 : index
      %c0_25 = arith.constant 0 : index
      %c0_26 = arith.constant 0 : index
      %18 = vector.load %arg6[%c0_24, %c0_25, %c0_26] : memref<1x32x1xf32, #tpu.memory_space<vmem>>, vector<1x32x1xf32>
      tpu.vector_store %arg6[%c0_24, %c0_25, %c0_26], %17 {strides = array<i32>} : memref<1x32x1xf32, #tpu.memory_space<vmem>>, vector<1x32x1xf32>,
    } else {
    }
    %c0 = arith.constant 0 : index
    %c0_1 = arith.constant 0 : index
    %c0_2 = arith.constant 0 : index
    %3 = vector.load %arg5[%c0, %c0_1, %c0_2] : memref<1x32x1xf32, #tpu.memory_space<vmem>>, vector<1x32x1xf32>
    %c0_3 = arith.constant 0 : index
    %c0_4 = arith.constant 0 : index
    %c0_5 = arith.constant 0 : index
    %4 = vector.load %arg3[%c0_3, %c0_4, %c0_5] : memref<1x32x256xf32, #tpu.memory_space<vmem>>, vector<1x32x256xf32>
    %cst = arith.constant dense<0.000000e+00> : vector<1x32xf32>
    %5 = vector.multi_reduction <add>, %4, %cst [2] : vector<1x32x256xf32> to vector<1x32xf32>
    %6 = vector.shape_cast %5 : vector<1x32xf32> to vector<1x32x1xf32>
    %7 = arith.addf %3, %6 : vector<1x32x1xf32>
    %c0_6 = arith.constant 0 : index
    %c0_7 = arith.constant 0 : index
    %c0_8 = arith.constant 0 : index
    %8 = vector.load %arg5[%c0_6, %c0_7, %c0_8] : memref<1x32x1xf32, #tpu.memory_space<vmem>>, vector<1x32x1xf32>
    tpu.vector_store %arg5[%c0_6, %c0_7, %c0_8], %7 {strides = array<i32>} : memref<1x32x1xf32, #tpu.memory_space<vmem>>, vector<1x32x1xf32>,
    %c0_9 = arith.constant 0 : index
    %c0_10 = arith.constant 0 : index
    %c0_11 = arith.constant 0 : index
    %9 = vector.load %arg6[%c0_9, %c0_10, %c0_11] : memref<1x32x1xf32, #tpu.memory_space<vmem>>, vector<1x32x1xf32>
    %c0_12 = arith.constant 0 : index
    %c0_13 = arith.constant 0 : index
    %c0_14 = arith.constant 0 : index
    %10 = vector.load %arg4[%c0_12, %c0_13, %c0_14] : memref<1x32x256xf32, #tpu.memory_space<vmem>>, vector<1x32x256xf32>
    %cst_15 = arith.constant dense<0.000000e+00> : vector<1x32xf32>
    %11 = vector.multi_reduction <add>, %10, %cst_15 [2] : vector<1x32x256xf32> to vector<1x32xf32>
    %12 = vector.shape_cast %11 : vector<1x32xf32> to vector<1x32x1xf32>
    %13 = arith.addf %9, %12 : vector<1x32x1xf32>
    %c0_16 = arith.constant 0 : index
    %c0_17 = arith.constant 0 : index
    %c0_18 = arith.constant 0 : index
    %14 = vector.load %arg6[%c0_16, %c0_17, %c0_18] : memref<1x32x1xf32, #tpu.memory_space<vmem>>, vector<1x32x1xf32>
    tpu.vector_store %arg6[%c0_16, %c0_17, %c0_18], %13 {strides = array<i32>} : memref<1x32x1xf32, #tpu.memory_space<vmem>>, vector<1x32x1xf32>,
    return
  }
  func.func @transform_0(%arg0: i32, %arg1: i32, %arg2: i32) -> (i32, i32, i32) {
    %c0_i32 = arith.constant 0 : i32
    return %arg0, %arg1, %arg2 : i32, i32, i32
  }
  func.func @transform_1(%arg0: i32, %arg1: i32, %arg2: i32) -> (i32, i32, i32) {
    %c0_i32 = arith.constant 0 : i32
    return %arg0, %arg1, %arg2 : i32, i32, i32
  }
  func.func @transform_2(%arg0: i32, %arg1: i32, %arg2: i32) -> (i32, i32, i32) {
    %c0_i32 = arith.constant 0 : i32
    %c0_i32_0 = arith.constant 0 : i32
    return %arg0, %arg1, %c0_i32 : i32, i32, i32
  }
  func.func @transform_3(%arg0: i32, %arg1: i32, %arg2: i32) -> (i32, i32, i32) {
    %c0_i32 = arith.constant 0 : i32
    %c0_i32_0 = arith.constant 0 : i32
    return %arg0, %arg1, %c0_i32 : i32, i32, i32
  }
}

</mosaic_0001>

<llo_original>
// kernel: tpu_custom_call.1
$region0: #{tpu_custom_call.1}
  #allocation0 [shape = 'u32[]', space=smem, size = 0x4, offset = 0x4, fixed_abs, tag = 'smem constant byte address 0x4 - core index']
  #allocation1 [shape = 'u32[144,128]{1,0:T(1,128)}', space=vmem, size = 0x12000, scoped, tag = 'internal scratch']
  %s0 = inlined_call_operand.hbm [shape: f32[2,32,256], index: 0, kind: input, shape index: {}]
  %s1 = inlined_call_operand.hbm [shape: f32[2,32,256], index: 1, kind: input, shape index: {}]
  %s2 = inlined_call_operand.vmem [shape: f32[2,32,1], index: 2, kind: output, shape index: {0}]
  %s3 = inlined_call_operand.vmem [shape: f32[2,32,1], index: 3, kind: output, shape index: {1}]
  %4 = xla_tuple %s2, %s3
  %s5 = sld [smem:[#allocation0]]
  $region61: #{tpu_custom_call.1} parent=0
    _
  %s7 = ssub.s32 1, %s5
  %s8 = scalar_select 0, %s7, %s5
  $region1: #{tpu_custom_call.1} parent=0
    #allocation2 [shape = 'u8[65536]{0}', space=vmem, size = 0x10000, scoped, tag = 'input window, operand 0']
    #allocation3 [shape = 's32[2]{0}', space=sflag, size = 0x8, scoped, tag = 'scoped memory for tpu_custom_call.1']
    #allocation4 [shape = 'u8[65536]{0}', space=vmem, size = 0x10000, scoped, tag = 'input window, operand 1']
    #allocation5 [shape = 's32[2]{0}', space=sflag, size = 0x8, scoped, tag = 'scoped memory for tpu_custom_call.1']
    %9 = vsyncpa [#allocation3], 0
    %s10 = scalar_lea.sflag [#allocation3], 1
    %11 = vsyncpa %s10, 0
    %12 = vsyncpa [#allocation5], 0
    %s13 = scalar_lea.sflag [#allocation5], 1
    %14 = vsyncpa %s13, 0
    loop: start=0, step=1, limit=4
    $region2: #{tpu_custom_call.1} parent=1 // loop_pre_header
      _
    $region3: #{tpu_custom_call.1} parent=1 // loop_header
      %s16 = sphi 0, %s20
      %p17 = scmp.ge.s32.totalorder %s16, 4
      %s23 = sphi 0, %s42
      %s24 = sphi 0, %s38
      %s25 = sphi 0, %s34
      %s26 = sphi 0, %s23
      %s27 = sphi 0, %s24
      %s28 = sphi 0, %s25
      %s29 = sphi 0, %s26
      %s30 = sphi 0, %s27
      %s31 = sphi 0, %s28
      %s49 = sphi 0, %s51
      %s52 = sphi 0, %s49
      %s53 = sphi 0, %s52
      %s69 = sphi 0, %s53
      %s79 = sphi 0, %s81
      %s82 = sphi 0, %s79
      %s83 = sphi 0, %s82
      %s99 = sphi 0, %s83
      %s107 = sphi 0, %s109
      %s110 = sphi 0, %s107
      %s111 = sphi 0, %s110
      %s127 = sphi 0, %s111
      %s135 = sphi 0, %s137
      %s138 = sphi 0, %s135
      %s139 = sphi 0, %s138
      %s155 = sphi 0, %s139
    $region4: #{tpu_custom_call.1} parent=1 // loop_header_branch
      %19 = sbr.rel (%p17) target = $region8
    $region5: #{tpu_custom_call.1} parent=1 // loop_body
      %s21 = ssub.s32 %s16, 1
      %s22 = ssub.s32 %s16, 2
      %s32 = sadd.s32 1, %s25
      %p33 = scmp.ge.s32.totalorder %s32, 1
      %s34 = scalar_select %p33, 0, %s32
      %s35 = sadd.s32 1, %s24
      %s36 = scalar_select %p33, %s35, %s24
      %p37 = scmp.ge.s32.totalorder %s36, 1
      %s38 = scalar_select %p37, 0, %s36
      %s39 = sadd.s32 1, %s23
      %s40 = scalar_select %p37, %s39, %s23
      %p41 = scmp.ge.s32.totalorder %s40, 2
      %s42 = scalar_select %p41, 0, %s40
      %s43 = ssub.s32 %s23, %s42
      %s44 = ssub.s32 %s24, %s38
      %s45 = sor.u32 %s43, %s44
      %s46 = ssub.s32 %s25, %s34
      %s47 = sor.u32 %s45, %s46
      %p48 = scmp.eq.s32.totalorder %s47, 0
      %s50 = sadd.s32 %s49, 1
      %s51 = scalar_select %p48, %s49, %s50
      %p54 = pneg %p48
      %p55 = scmp.eq.s32.totalorder %s16, 1
      %p56 = por %p54, %p55
      %p57 = scmp.ne.s32.totalorder %s49, %s52
      %p58 = scmp.eq.s32.totalorder %s16, 0
      %p59 = por %p57, %p58
      %p60 = scmp.ne.s32.totalorder %s49, %s52
      %p61 = scmp.eq.s32.totalorder %s21, 1
      %p62 = por %p60, %p61
      %p63 = scmp.ne.s32.totalorder %s52, %s53
      %p64 = scmp.eq.s32.totalorder %s21, 0
      %p65 = por %p63, %p64
      %p66 = scmp.ne.s32.totalorder %s52, %s53
      %p67 = scmp.eq.s32.totalorder %s22, 1
      %p68 = por %p66, %p67
      %p70 = scmp.ne.s32.totalorder %s53, %s69
      %p71 = scmp.eq.s32.totalorder %s22, 0
      %p72 = por %p70, %p71
      %s73 = ssub.s32 %s23, %s42
      %s74 = ssub.s32 %s24, %s38
      %s75 = sor.u32 %s73, %s74
      %s76 = ssub.s32 %s25, %s34
      %s77 = sor.u32 %s75, %s76
      %p78 = scmp.eq.s32.totalorder %s77, 0
      %s80 = sadd.s32 %s79, 1
      %s81 = scalar_select %p78, %s79, %s80
      %p84 = pneg %p78
      %p85 = scmp.eq.s32.totalorder %s16, 1
      %p86 = por %p84, %p85
      %p87 = scmp.ne.s32.totalorder %s79, %s82
      %p88 = scmp.eq.s32.totalorder %s16, 0
      %p89 = por %p87, %p88
      %p90 = scmp.ne.s32.totalorder %s79, %s82
      %p91 = scmp.eq.s32.totalorder %s21, 1
      %p92 = por %p90, %p91
      %p93 = scmp.ne.s32.totalorder %s82, %s83
      %p94 = scmp.eq.s32.totalorder %s21, 0
      %p95 = por %p93, %p94
      %p96 = scmp.ne.s32.totalorder %s82, %s83
      %p97 = scmp.eq.s32.totalorder %s22, 1
      %p98 = por %p96, %p97
      %p100 = scmp.ne.s32.totalorder %s83, %s99
      %p101 = scmp.eq.s32.totalorder %s22, 0
      %p102 = por %p100, %p101
      %s103 = ssub.s32 %s23, %s42
      %s104 = ssub.s32 %s24, %s38
      %s105 = sor.u32 %s103, %s104
      %p106 = scmp.eq.s32.totalorder %s105, 0
      %s108 = sadd.s32 %s107, 1
      %s109 = scalar_select %p106, %s107, %s108
      %p112 = pneg %p106
      %p113 = scmp.eq.s32.totalorder %s16, 1
      %p114 = por %p112, %p113
      %p115 = scmp.ne.s32.totalorder %s107, %s110
      %p116 = scmp.eq.s32.totalorder %s16, 0
      %p117 = por %p115, %p116
      %p118 = scmp.ne.s32.totalorder %s107, %s110
      %p119 = scmp.eq.s32.totalorder %s21, 1
      %p120 = por %p118, %p119
      %p121 = scmp.ne.s32.totalorder %s110, %s111
      %p122 = scmp.eq.s32.totalorder %s21, 0
      %p123 = por %p121, %p122
      %p124 = scmp.ne.s32.totalorder %s110, %s111
      %p125 = scmp.eq.s32.totalorder %s22, 1
      %p126 = por %p124, %p125
      %p128 = scmp.ne.s32.totalorder %s111, %s127
      %p129 = scmp.eq.s32.totalorder %s22, 0
      %p130 = por %p128, %p129
      %s131 = ssub.s32 %s23, %s42
      %s132 = ssub.s32 %s24, %s38
      %s133 = sor.u32 %s131, %s132
      %p134 = scmp.eq.s32.totalorder %s133, 0
      %s136 = sadd.s32 %s135, 1
      %s137 = scalar_select %p134, %s135, %s136
      %p140 = pneg %p134
      %p141 = scmp.eq.s32.totalorder %s16, 1
      %p142 = por %p140, %p141
      %p143 = scmp.ne.s32.totalorder %s135, %s138
      %p144 = scmp.eq.s32.totalorder %s16, 0
      %p145 = por %p143, %p144
      %p146 = scmp.ne.s32.totalorder %s135, %s138
      %p147 = scmp.eq.s32.totalorder %s21, 1
      %p148 = por %p146, %p147
      %p149 = scmp.ne.s32.totalorder %s138, %s139
      %p150 = scmp.eq.s32.totalorder %s21, 0
      %p151 = por %p149, %p150
      %p152 = scmp.ne.s32.totalorder %s138, %s139
      %p153 = scmp.eq.s32.totalorder %s22, 1
      %p154 = por %p152, %p153
      %p156 = scmp.ne.s32.totalorder %s139, %s155
      %p157 = scmp.eq.s32.totalorder %s22, 0
      %p158 = por %p156, %p157
      %p159 = scmp.le.s32.totalorder 1, %s16
      %p160 = scmp.lt.s32.totalorder %s16, 3
      %p161 = pnand %p159, %p160
      %p162 = pneg %p161
      // Predicated region
      $region9: #{tpu_custom_call.1} parent=5 // pred_check
        _
      $region10: #{tpu_custom_call.1} parent=5 // pred_check_branch
        %164 = sbr.rel (%p161) target = $region12
      $region11: #{tpu_custom_call.1} parent=5 // pred_region
        %s165 = ssub.s32 %s16, 1
      $region12: #{tpu_custom_call.1} parent=5 // pred_fallthru
        _
      %p166 = scmp.lt.s32.totalorder %s16, 2
      // Predicated region
      $region13: #{tpu_custom_call.1} parent=5 // pred_check
        %p167 = pneg %p166
      $region14: #{tpu_custom_call.1} parent=5 // pred_check_branch
        %169 = sbr.rel (%p167) target = $region16
      $region15: #{tpu_custom_call.1} parent=5 // pred_region
        // Predicated region
        $region17: #{tpu_custom_call.1} parent=15 // pred_check
          %p170 = pneg %p59
        $region18: #{tpu_custom_call.1} parent=15 // pred_check_branch
          %172 = sbr.rel (%p170) target = $region20
        $region19: #{tpu_custom_call.1} parent=15 // pred_region
          %s173 = sand.u32 %s49, 1
          %s174 = scalar_lea.sflag [#allocation3], %s173
          %s175 = sand.u32 %s49, 1
          %s176 = smul.addr %s175, 64
          %s177 = scalar_lea.vmem [#allocation2], %s176
          %s178 = smul.u32 4, %s24
          %s179 = smul.u32 2, %s25
          %s181 = ssub.s32 1024, 1024
          %182 = vsyncadd %s174, %s181
          %s183 = smul.addr %s178, 2
          %s184 = sadd.s32 %s179, %s183
          %s185 = smul.addr %s23, 8
          %s186 = sadd.s32 %s184, %s185
          %s187 = smul.addr %s186, 128
          %s188 = scalar_lea.hbm %s0, %s187
          %s189 = sshll.u32 %s177, 4
          %s190 = int_to_ptr.vmem [resolvable:$true] %s189
          %195 = dma.hbm_to_vmem [thread:$0]  %s188, 1024, %s190, %s174, 256, 256, 16
        $region20: #{tpu_custom_call.1} parent=15 // pred_fallthru
          _
        // Predicated region
        $region21: #{tpu_custom_call.1} parent=15 // pred_check
          %p196 = pneg %p89
        $region22: #{tpu_custom_call.1} parent=15 // pred_check_branch
          %198 = sbr.rel (%p196) target = $region24
        $region23: #{tpu_custom_call.1} parent=15 // pred_region
          %s199 = sand.u32 %s79, 1
          %s200 = scalar_lea.sflag [#allocation5], %s199
          %s201 = sand.u32 %s79, 1
          %s202 = smul.addr %s201, 64
          %s203 = scalar_lea.vmem [#allocation4], %s202
          %s204 = smul.u32 4, %s24
          %s205 = smul.u32 2, %s25
          %s207 = ssub.s32 1024, 1024
          %208 = vsyncadd %s200, %s207
          %s209 = smul.addr %s204, 2
          %s210 = sadd.s32 %s205, %s209
          %s211 = smul.addr %s23, 8
          %s212 = sadd.s32 %s210, %s211
          %s213 = smul.addr %s212, 128
          %s214 = scalar_lea.hbm %s1, %s213
          %s215 = sshll.u32 %s203, 4
          %s216 = int_to_ptr.vmem [resolvable:$true] %s215
          %221 = dma.hbm_to_vmem [thread:$0]  %s214, 1024, %s216, %s200, 256, 256, 16
        $region24: #{tpu_custom_call.1} parent=15 // pred_fallthru
          _
      $region16: #{tpu_custom_call.1} parent=5 // pred_fallthru
        _
      %p222 = scmp.le.s32.totalorder 1, %s16
      %p223 = scmp.lt.s32.totalorder %s16, 3
      %p224 = pnand %p222, %p223
      %p225 = pneg %p224
      // Predicated region
      $region25: #{tpu_custom_call.1} parent=5 // pred_check
        _
      $region26: #{tpu_custom_call.1} parent=5 // pred_check_branch
        %227 = sbr.rel (%p224) target = $region28
      $region27: #{tpu_custom_call.1} parent=5 // pred_region
        %s228 = ssub.s32 %s16, 1
        %s229 = sand.u32 %s52, 1
        %s230 = scalar_lea.sflag [#allocation3], %s229
        %s231 = sand.u32 %s52, 1
        %s232 = smul.addr %s231, 64
        %s233 = scalar_lea.vmem [#allocation2], %s232
        // Predicated region
        $region29: #{tpu_custom_call.1} parent=27 // pred_check
          %p234 = pneg %p65
        $region30: #{tpu_custom_call.1} parent=27 // pred_check_branch
          %236 = sbr.rel (%p234) target = $region32
        $region31: #{tpu_custom_call.1} parent=27 // pred_region
          %237 = dma.done %s230, 1024
        $region32: #{tpu_custom_call.1} parent=27 // pred_fallthru
          _
        %s238 = sand.u32 %s82, 1
        %s239 = scalar_lea.sflag [#allocation5], %s238
        %s240 = sand.u32 %s82, 1
        %s241 = smul.addr %s240, 64
        %s242 = scalar_lea.vmem [#allocation4], %s241
        // Predicated region
        $region33: #{tpu_custom_call.1} parent=27 // pred_check
          %p243 = pneg %p95
        $region34: #{tpu_custom_call.1} parent=27 // pred_check_branch
          %245 = sbr.rel (%p243) target = $region36
        $region35: #{tpu_custom_call.1} parent=27 // pred_region
          %246 = dma.done %s239, 1024
        $region36: #{tpu_custom_call.1} parent=27 // pred_fallthru
          _
        %s247 = sand.u32 %s52, 1
        %s248 = scalar_lea.sflag [#allocation3], %s247
        %s249 = sand.u32 %s52, 1
        %s250 = smul.addr %s249, 64
        %s251 = scalar_lea.vmem [#allocation2], %s250
        %p252 = pneg %p65
        %p253 = pneg %p62
        %s254 = sand.u32 %s82, 1
        %s255 = scalar_lea.sflag [#allocation5], %s254
        %s256 = sand.u32 %s82, 1
        %s257 = smul.addr %s256, 64
        %s258 = scalar_lea.vmem [#allocation4], %s257
        %p259 = pneg %p95
        %p260 = pneg %p92
        %p261 = pneg %p123
        %p262 = pneg %p120
        %s263 = smul.u32 4, %s27
        %p264 = scmp.lt.s32.totalorder %s26, 1
        %s265 = scalar_select %p264, %s26, 1
        %p266 = scmp.lt.s32.totalorder %s263, 3
        %s267 = scalar_select %p266, %s263, 3
        %s268 = smul.addr %s265, 4
        %s269 = sadd.s32 %s267, %s268
        %s270 = smul.addr %s269, 8
        %s271 = scalar_lea.vmem %s2, %s270
        %p272 = pneg %p151
        %p273 = pneg %p148
        %s274 = smul.u32 4, %s27
        %p275 = scmp.lt.s32.totalorder %s26, 1
        %s276 = scalar_select %p275, %s26, 1
        %p277 = scmp.lt.s32.totalorder %s274, 3
        %s278 = scalar_select %p277, %s274, 3
        %s279 = smul.addr %s276, 4
        %s280 = sadd.s32 %s278, %s279
        %s281 = smul.addr %s280, 8
        %s282 = scalar_lea.vmem %s3, %s281
        %s283 = smul.u32 4, %s27
        %s284 = smul.u32 2, %s28
        %s285 = smul.u32 4, %s27
        %s286 = smul.u32 2, %s28
        %s287 = smul.u32 4, %s27
        %p288 = scmp.lt.s32.totalorder %s26, 1
        %s289 = scalar_select %p288, %s26, 1
        %p290 = scmp.lt.s32.totalorder %s287, 3
        %s291 = scalar_select %p290, %s287, 3
        %s292 = smul.addr %s289, 4
        %s293 = sadd.s32 %s291, %s292
        %s294 = smul.addr %s293, 8
        %s295 = scalar_lea.vmem %s2, %s294
        %s296 = smul.u32 4, %s27
        %s297 = smul.u32 4, %s27
        %p298 = scmp.lt.s32.totalorder %s26, 1
        %s299 = scalar_select %p298, %s26, 1
        %p300 = scmp.lt.s32.totalorder %s297, 3
        %s301 = scalar_select %p300, %s297, 3
        %s302 = smul.addr %s299, 4
        %s303 = sadd.s32 %s301, %s302
        %s304 = smul.addr %s303, 8
        %s305 = scalar_lea.vmem %s3, %s304
        %s306 = smul.u32 4, %s27
        %p307 = scmp.eq.s32.totalorder %s28, 0
        // Predicated region
        $region37: #{tpu_custom_call.1} parent=27 // pred_check
          %p308 = pneg %p307
        $region38: #{tpu_custom_call.1} parent=27 // pred_check_branch
          %310 = sbr.rel (%p308) target = $region40
        $region39: #{tpu_custom_call.1} parent=27 // pred_region
          %vm311 = vcmask 7168
          %312 = vst.msk [vmem:[%s295] sm:$0xff] %vm311, 0.0
          %313 = vst.msk [vmem:[%s295 + $0x8] sm:$0xff] %vm311, 0.0
          %314 = vst.msk [vmem:[%s295 + $0x10] sm:$0xff] %vm311, 0.0
          %315 = vst.msk [vmem:[%s295 + $0x18] sm:$0xff] %vm311, 0.0
          %316 = vst.msk [vmem:[%s305] sm:$0xff] %vm311, 0.0
          %317 = vst.msk [vmem:[%s305 + $0x8] sm:$0xff] %vm311, 0.0
          %318 = vst.msk [vmem:[%s305 + $0x10] sm:$0xff] %vm311, 0.0
          %319 = vst.msk [vmem:[%s305 + $0x18] sm:$0xff] %vm311, 0.0
        $region40: #{tpu_custom_call.1} parent=27 // pred_fallthru
          _
        %v320 = vld [vmem:[%s295] sm:$0xff]
        %v321 = vld [vmem:[%s295 + $0x8] sm:$0xff]
        %v322 = vld [vmem:[%s295 + $0x10] sm:$0xff]
        %v323 = vld [vmem:[%s295 + $0x18] sm:$0xff]
        %v324 = vld [vmem:[%s233] sm:$0xff]
        %v325 = vld [vmem:[%s233 + $0x8] sm:$0xff]
        %v326 = vld [vmem:[%s233 + $0x10] sm:$0xff]
        %v327 = vld [vmem:[%s233 + $0x18] sm:$0xff]
        %v328 = vld [vmem:[%s233 + $0x20] sm:$0xff]
        %v329 = vld [vmem:[%s233 + $0x28] sm:$0xff]
        %v330 = vld [vmem:[%s233 + $0x30] sm:$0xff]
        %v331 = vld [vmem:[%s233 + $0x38] sm:$0xff]
        %v332 = vadd.f32 %v324, %v325
        %333 = vadd.xlane.f32.xlu0 %v332
        %v334 = vpop.xlane.xlu0 %333
        %v335 = vadd.f32 %v326, %v327
        %336 = vadd.xlane.f32.xlu0 %v335
        %v337 = vpop.xlane.xlu0 %336
        %v338 = vadd.f32 %v328, %v329
        %339 = vadd.xlane.f32.xlu0 %v338
        %v340 = vpop.xlane.xlu0 %339
        %v341 = vadd.f32 %v330, %v331
        %342 = vadd.xlane.f32.xlu0 %v341
        %v343 = vpop.xlane.xlu0 %342
        %v344 = vadd.f32 %v320, %v334
        %v345 = vadd.f32 %v321, %v337
        %v346 = vadd.f32 %v322, %v340
        %v347 = vadd.f32 %v323, %v343
        %vm348 = vcmask 7168
        %349 = vst.msk [vmem:[%s295] sm:$0xff] %vm348, %v344
        %350 = vst.msk [vmem:[%s295 + $0x8] sm:$0xff] %vm348, %v345
        %351 = vst.msk [vmem:[%s295 + $0x10] sm:$0xff] %vm348, %v346
        %352 = vst.msk [vmem:[%s295 + $0x18] sm:$0xff] %vm348, %v347
        %v353 = vld [vmem:[%s305] sm:$0xff]
        %v354 = vld [vmem:[%s305 + $0x8] sm:$0xff]
        %v355 = vld [vmem:[%s305 + $0x10] sm:$0xff]
        %v356 = vld [vmem:[%s305 + $0x18] sm:$0xff]
        %v357 = vld [vmem:[%s242] sm:$0xff]
        %v358 = vld [vmem:[%s242 + $0x8] sm:$0xff]
        %v359 = vld [vmem:[%s242 + $0x10] sm:$0xff]
        %v360 = vld [vmem:[%s242 + $0x18] sm:$0xff]
        %v361 = vld [vmem:[%s242 + $0x20] sm:$0xff]
        %v362 = vld [vmem:[%s242 + $0x28] sm:$0xff]
        %v363 = vld [vmem:[%s242 + $0x30] sm:$0xff]
        %v364 = vld [vmem:[%s242 + $0x38] sm:$0xff]
        %v365 = vadd.f32 %v357, %v358
        %366 = vadd.xlane.f32.xlu0 %v365
        %v367 = vpop.xlane.xlu0 %366
        %v368 = vadd.f32 %v359, %v360
        %369 = vadd.xlane.f32.xlu0 %v368
        %v370 = vpop.xlane.xlu0 %369
        %v371 = vadd.f32 %v361, %v362
        %372 = vadd.xlane.f32.xlu0 %v371
        %v373 = vpop.xlane.xlu0 %372
        %v374 = vadd.f32 %v363, %v364
        %375 = vadd.xlane.f32.xlu0 %v374
        %v376 = vpop.xlane.xlu0 %375
        %v377 = vadd.f32 %v353, %v367
        %v378 = vadd.f32 %v354, %v370
        %v379 = vadd.f32 %v355, %v373
        %v380 = vadd.f32 %v356, %v376
        %381 = vst.msk [vmem:[%s305] sm:$0xff] %vm348, %v377
        %382 = vst.msk [vmem:[%s305 + $0x8] sm:$0xff] %vm348, %v378
        %383 = vst.msk [vmem:[%s305 + $0x10] sm:$0xff] %vm348, %v379
        %384 = vst.msk [vmem:[%s305 + $0x18] sm:$0xff] %vm348, %v380
        %s385 = smul.u32 4, %s27
        %p386 = scmp.lt.s32.totalorder %s26, 1
        %s387 = scalar_select %p386, %s26, 1
        %p388 = scmp.lt.s32.totalorder %s385, 3
        %s389 = scalar_select %p388, %s385, 3
        %s390 = smul.addr %s387, 4
        %s391 = sadd.s32 %s389, %s390
        %s392 = smul.addr %s391, 8
        %s393 = scalar_lea.vmem %s2, %s392
        %s394 = smul.u32 4, %s27
        %p395 = scmp.lt.s32.totalorder %s26, 1
        %s396 = scalar_select %p395, %s26, 1
        %p397 = scmp.lt.s32.totalorder %s394, 3
        %s398 = scalar_select %p397, %s394, 3
        %s399 = smul.addr %s396, 4
        %s400 = sadd.s32 %s398, %s399
        %s401 = smul.addr %s400, 8
        %s402 = scalar_lea.vmem %s3, %s401
        // Predicated region
        $region41: #{tpu_custom_call.1} parent=27 // pred_check
          %p403 = pneg %p120
        $region42: #{tpu_custom_call.1} parent=27 // pred_check_branch
          %405 = sbr.rel (%p403) target = $region44
        $region43: #{tpu_custom_call.1} parent=27 // pred_region
          %s406 = smul.u32 4, %s27
        $region44: #{tpu_custom_call.1} parent=27 // pred_fallthru
          _
        // Predicated region
        $region45: #{tpu_custom_call.1} parent=27 // pred_check
          %p407 = pneg %p148
        $region46: #{tpu_custom_call.1} parent=27 // pred_check_branch
          %409 = sbr.rel (%p407) target = $region48
        $region47: #{tpu_custom_call.1} parent=27 // pred_region
          %s410 = smul.u32 4, %s27
        $region48: #{tpu_custom_call.1} parent=27 // pred_fallthru
          _
      $region28: #{tpu_custom_call.1} parent=5 // pred_fallthru
        _
      %p411 = scmp.le.s32.totalorder 2, %s16
      // Predicated region
      $region49: #{tpu_custom_call.1} parent=5 // pred_check
        %p412 = pneg %p411
      $region50: #{tpu_custom_call.1} parent=5 // pred_check_branch
        %414 = sbr.rel (%p412) target = $region52
      $region51: #{tpu_custom_call.1} parent=5 // pred_region
        %s415 = ssub.s32 %s16, 2
        // Predicated region
        $region53: #{tpu_custom_call.1} parent=51 // pred_check
          %p416 = pneg %p126
        $region54: #{tpu_custom_call.1} parent=51 // pred_check_branch
          %418 = sbr.rel (%p416) target = $region56
        $region55: #{tpu_custom_call.1} parent=51 // pred_region
          %s419 = smul.u32 4, %s30
          %p420 = scmp.lt.s32.totalorder %s29, 1
          %s421 = scalar_select %p420, %s29, 1
          %p422 = scmp.lt.s32.totalorder %s419, 3
          %s423 = scalar_select %p422, %s419, 3
          %s424 = smul.addr %s421, 4
          %s425 = sadd.s32 %s423, %s424
          %s426 = smul.addr %s425, 8
          %s427 = scalar_lea.vmem %s2, %s426
        $region56: #{tpu_custom_call.1} parent=51 // pred_fallthru
          _
        // Predicated region
        $region57: #{tpu_custom_call.1} parent=51 // pred_check
          %p428 = pneg %p154
        $region58: #{tpu_custom_call.1} parent=51 // pred_check_branch
          %430 = sbr.rel (%p428) target = $region60
        $region59: #{tpu_custom_call.1} parent=51 // pred_region
          %s431 = smul.u32 4, %s30
          %p432 = scmp.lt.s32.totalorder %s29, 1
          %s433 = scalar_select %p432, %s29, 1
          %p434 = scmp.lt.s32.totalorder %s431, 3
          %s435 = scalar_select %p434, %s431, 3
          %s436 = smul.addr %s433, 4
          %s437 = sadd.s32 %s435, %s436
          %s438 = smul.addr %s437, 8
          %s439 = scalar_lea.vmem %s3, %s438
        $region60: #{tpu_custom_call.1} parent=51 // pred_fallthru
          _
      $region52: #{tpu_custom_call.1} parent=5 // pred_fallthru
        _
    $region6: #{tpu_custom_call.1} parent=1 // loop_footer
      %s20 = sadd.s32 1, %s16
    $region7: #{tpu_custom_call.1} parent=1 // loop_footer_branch
      %15 = sbr.rel target = $region3
    $region8: #{tpu_custom_call.1} parent=1 // loop_exit
      _
    %440 = vsyncpa [#allocation3], 1
    %s441 = scalar_lea.sflag [#allocation3], 1
    %442 = vsyncpa %s441, 1
    %443 = vsyncpa [#allocation5], 1
    %s444 = scalar_lea.sflag [#allocation5], 1
    %445 = vsyncpa %s444, 1

</llo_original>
